<compile_context>
chip_gen: v6e
topology: v6e:2x2x1
jax: 0.10.0
libtpu: 0.0.40
codegen_flags: <defaults>
</compile_context>

<pallas_src>
import jax
import jax.numpy as jnp
from jax import lax
from jax.experimental import pallas as pl
from jax.experimental.pallas import tpu as pltpu


def _choose_batch_tile(batch, num_classes, in_itemsize, weight_bytes):
    """Pick a batch tile that keeps double-buffered inputs (+temps) in VMEM.

    Budget is conservative enough for v7x (64 MiB physical VMEM) while still
    giving large, HBM-roofline-friendly tiles on v5e/v6e.
    """
    budget = 34 * 1024 * 1024
    budget -= 2 * weight_bytes            # resident (double-buffered) weight
    budget = max(budget, 1)
    # per tile row: 2 double-buffered input streams + ~4 f32 temporaries
    per_row = num_classes * (2 * 2 * in_itemsize + 4 * 4)
    tb = budget // max(per_row, 1)
    tb = int(max(8, min(tb, 1024)))
    if tb >= batch:
        return batch                      # single block == full dim (always legal)
    if tb >= 128:
        return (tb // 128) * 128          # MXU / lane friendly
    return (tb // 8) * 8                  # sublane aligned


def _make_kernel(T, batch, tb, use_weight, mask_rows):
    inv_T = 1.0 / float(T)

    def _tile_loss(zs, zt, tile_idx):
        # student log-softmax (numerically stable)
        m_s = jnp.max(zs, axis=1, keepdims=True)
        e_s = jnp.exp(zs - m_s)
        ls = (zs - m_s) - jnp.log(jnp.sum(e_s, axis=1, keepdims=True))
        # teacher softmax + log-softmax from a single exp
        m_t = jnp.max(zt, axis=1, keepdims=True)
        e_t = jnp.exp(zt - m_t)
        sum_t = jnp.sum(e_t, axis=1, keepdims=True)
        lt = (zt - m_t) - jnp.log(sum_t)
        pt = e_t * (1.0 / sum_t)          # exact per-row reciprocal (tb values)
        kl_row = jnp.sum(pt * (lt - ls), axis=1, keepdims=True)   # (tb, 1)
        if mask_rows:
            row = tile_idx * tb + lax.broadcasted_iota(jnp.int32, kl_row.shape, 0)
            kl_row = jnp.where(row < batch, kl_row, 0.0)
        return jnp.sum(kl_row)

    if use_weight:
        def kernel(ys_ref, yt_ref, w_ref, out_ref):
            i = pl.program_id(0)
            ys = ys_ref[...].astype(jnp.float32)
            w = w_ref[...].astype(jnp.float32)
            # y_s @ weight.T without an explicit transpose: contract dim 1 of
            # ys with dim 1 of w, feeding the MXU directly.
            logits_s = lax.dot_general(
                ys, w, (((1,), (1,)), ((), ())),
                preferred_element_type=jnp.float32)
            zs = logits_s * inv_T
            zt = yt_ref[...].astype(jnp.float32) * inv_T
            out_ref[...] = jnp.full(out_ref.shape, _tile_loss(zs, zt, i),
                                    dtype=jnp.float32)
    else:
        def kernel(ys_ref, yt_ref, out_ref):
            i = pl.program_id(0)
            zs = ys_ref[...].astype(jnp.float32) * inv_T
            zt = yt_ref[...].astype(jnp.float32) * inv_T
            out_ref[...] = jnp.full(out_ref.shape, _tile_loss(zs, zt, i),
                                    dtype=jnp.float32)

    return kernel


def distill_kl(y_s, y_t, T=4, weight=None, batch_tile=None):
    """Pallas implementation of DistillKL.forward. Returns a scalar f32 loss."""
    batch = y_s.shape[0]
    num_classes = y_t.shape[1]
    use_weight = weight is not None
    if use_weight:
        assert weight.shape == (num_classes, y_s.shape[1])
        weight_bytes = weight.size * jnp.dtype(weight.dtype).itemsize
    else:
        assert y_s.shape[1] == num_classes
        weight_bytes = 0
    # TODO(synk): very large projection weights (C x K f32 > ~15 MiB) should be
    # K-tiled or stored bf16 to stay within v7x VMEM; not needed at these sizes.

    if batch_tile is None:
        tb = _choose_batch_tile(batch, num_classes,
                                jnp.dtype(y_s.dtype).itemsize, weight_bytes)
    else:
        tb = int(batch_tile)
    num_tiles = pl.cdiv(batch, tb)
    mask_rows = (batch % tb) != 0

    kernel = _make_kernel(T, batch, tb, use_weight, mask_rows)

    in_specs = [
        pl.BlockSpec((tb, y_s.shape[1]), lambda i: (i, 0)),
        pl.BlockSpec((tb, num_classes), lambda i: (i, 0)),
    ]
    args = (y_s, y_t)
    if use_weight:
        # Full weight resident across all batch tiles (constant index_map).
        in_specs.append(pl.BlockSpec(weight.shape, lambda i: (0, 0)))
        args = args + (weight,)

    partials = pl.pallas_call(
        kernel,
        out_shape=jax.ShapeDtypeStruct((num_tiles, 8, 128), jnp.float32),
        grid=(num_tiles,),
        in_specs=in_specs,
        # per-tile partial sums -> batch axis can be "parallel" (v7x megacore)
        out_specs=pl.BlockSpec((1, 8, 128), lambda i: (i, 0, 0)),
        compiler_params=pltpu.CompilerParams(
            dimension_semantics=("parallel",),
            vmem_limit_bytes=48 * 1024 * 1024),
    )(*args)

    scale = (float(T) ** 2) / float(batch)
    return jnp.sum(partials[:, 0, 0]) * scale


def _ref_distill_kl(y_s, y_t, T=4.0, weight=None):
    if weight is not None:
        y_s = y_s @ weight.T
    ps = jax.nn.log_softmax(y_s / T, axis=1)
    pt = jax.nn.softmax(y_t / T, axis=1)
    return jnp.sum(pt * (jnp.log(pt) - ps)) * (T ** 2) / y_s.shape[0]


if __name__ == "__main__":
    key = jax.random.PRNGKey(0)
    k1, k2, k3, k4, k5, k6 = jax.random.split(key, 6)

    T = 4
    batch, num_classes, in_features = 8, 32, 16

    # ---- default path (weight=None, as in DistillKL defaults) ----
    y_s = jax.random.normal(k1, (batch, num_classes), dtype=jnp.float32)
    y_t = jax.random.normal(k2, (batch, num_classes), dtype=jnp.float32)
    loss = distill_kl(y_s, y_t, T=T)
    jax.block_until_ready(loss)
    ref = _ref_distill_kl(y_s, y_t, T=float(T))
    assert jnp.allclose(loss, ref, atol=1e-5, rtol=1e-4), (loss, ref)

    # ---- optional projection-weight path (y_s @ W.T inside the kernel) ----
    y_s2 = jax.random.normal(k3, (batch, in_features), dtype=jnp.float32)
    weight = (jax.random.normal(k4, (num_classes, in_features),
                                dtype=jnp.float32) * 0.1)
    loss_w = distill_kl(y_s2, y_t, T=T, weight=weight)
    jax.block_until_ready(loss_w)
    ref_w = _ref_distill_kl(y_s2, y_t, T=float(T), weight=weight)
    assert jnp.allclose(loss_w, ref_w, atol=1e-5, rtol=1e-4), (loss_w, ref_w)

    # ---- multi-tile grid path (batch not divisible by tile, masking) ----
    big_b, big_c = 200, 256
    y_s3 = jax.random.normal(k5, (big_b, big_c), dtype=jnp.float32)
    y_t3 = jax.random.normal(k6, (big_b, big_c), dtype=jnp.float32)
    loss_g = distill_kl(y_s3, y_t3, T=T, batch_tile=128)
    jax.block_until_ready(loss_g)
    ref_g = _ref_distill_kl(y_s3, y_t3, T=float(T))
    assert jnp.allclose(loss_g, ref_g, atol=1e-5, rtol=1e-4), (loss_g, ref_g)

    print("KERNEL_OK")
</pallas_src>

<mosaic_0001>
module attributes {stable_mosaic.version = 11 : i64} {
  func.func @kernel(%arg0: i32, %arg1: memref<8x32xf32, #tpu.memory_space<vmem>>, %arg2: memref<8x32xf32, #tpu.memory_space<vmem>>, %arg3: memref<1x8x128xf32, #tpu.memory_space<vmem>>) attributes {dimension_semantics = [#tpu.dimension_semantics<parallel>], iteration_bounds = array<i64: 1>, scalar_prefetch = 0 : i64, scratch_operands = 0 : i64, tpu.core_type = #tpu.core_type<tc>, window_params = [{transform_indices = @transform_0, window_bounds = array<i64: 8, 32>}, {transform_indices = @transform_1, window_bounds = array<i64: 8, 32>}, {transform_indices = @transform_2, window_bounds = array<i64: 1, 8, 128>}]} {
    %c0 = arith.constant 0 : index
    %c0_0 = arith.constant 0 : index
    %0 = vector.load %arg1[%c0, %c0_0] : memref<8x32xf32, #tpu.memory_space<vmem>>, vector<8x32xf32>
    %cst = arith.constant 2.500000e-01 : f32
    %1 = vector.broadcast %cst : f32 to vector<8x32xf32>
    %2 = arith.mulf %0, %1 : vector<8x32xf32>
    %c0_1 = arith.constant 0 : index
    %c0_2 = arith.constant 0 : index
    %3 = vector.load %arg2[%c0_1, %c0_2] : memref<8x32xf32, #tpu.memory_space<vmem>>, vector<8x32xf32>
    %cst_3 = arith.constant 2.500000e-01 : f32
    %4 = vector.broadcast %cst_3 : f32 to vector<8x32xf32>
    %5 = arith.mulf %3, %4 : vector<8x32xf32>
    %cst_4 = arith.constant dense<0xFF800000> : vector<8xf32>
    %6 = vector.multi_reduction <maximumf>, %2, %cst_4 [1] : vector<8x32xf32> to vector<8xf32>
    %7 = vector.shape_cast %6 : vector<8xf32> to vector<8x1xf32>
    %8 = vector.broadcast %7 : vector<8x1xf32> to vector<8x32xf32>
    %9 = arith.subf %2, %8 : vector<8x32xf32>
    %10 = math.exp %9 : vector<8x32xf32>
    %11 = vector.broadcast %7 : vector<8x1xf32> to vector<8x32xf32>
    %12 = arith.subf %2, %11 : vector<8x32xf32>
    %cst_5 = arith.constant dense<0.000000e+00> : vector<8xf32>
    %13 = vector.multi_reduction <add>, %10, %cst_5 [1] : vector<8x32xf32> to vector<8xf32>
    %14 = vector.shape_cast %13 : vector<8xf32> to vector<8x1xf32>
    %15 = math.log %14 : vector<8x1xf32>
    %16 = vector.broadcast %15 : vector<8x1xf32> to vector<8x32xf32>
    %17 = arith.subf %12, %16 : vector<8x32xf32>
    %cst_6 = arith.constant dense<0xFF800000> : vector<8xf32>
    %18 = vector.multi_reduction <maximumf>, %5, %cst_6 [1] : vector<8x32xf32> to vector<8xf32>
    %19 = vector.shape_cast %18 : vector<8xf32> to vector<8x1xf32>
    %20 = vector.broadcast %19 : vector<8x1xf32> to vector<8x32xf32>
    %21 = arith.subf %5, %20 : vector<8x32xf32>
    %22 = math.exp %21 : vector<8x32xf32>
    %cst_7 = arith.constant dense<0.000000e+00> : vector<8xf32>
    %23 = vector.multi_reduction <add>, %22, %cst_7 [1] : vector<8x32xf32> to vector<8xf32>
    %24 = vector.shape_cast %23 : vector<8xf32> to vector<8x1xf32>
    %25 = vector.broadcast %19 : vector<8x1xf32> to vector<8x32xf32>
    %26 = arith.subf %5, %25 : vector<8x32xf32>
    %27 = math.log %24 : vector<8x1xf32>
    %28 = vector.broadcast %27 : vector<8x1xf32> to vector<8x32xf32>
    %29 = arith.subf %26, %28 : vector<8x32xf32>
    %cst_8 = arith.constant 1.000000e+00 : f32
    %30 = vector.broadcast %cst_8 : f32 to vector<8x1xf32>
    %31 = arith.divf %30, %24 : vector<8x1xf32>
    %32 = vector.broadcast %31 : vector<8x1xf32> to vector<8x32xf32>
    %33 = arith.mulf %22, %32 : vector<8x32xf32>
    %34 = arith.subf %29, %17 : vector<8x32xf32>
    %35 = arith.mulf %33, %34 : vector<8x32xf32>
    %cst_9 = arith.constant dense<0.000000e+00> : vector<8xf32>
    %36 = vector.multi_reduction <add>, %35, %cst_9 [1] : vector<8x32xf32> to vector<8xf32>
    %37 = vector.shape_cast %36 : vector<8xf32> to vector<8x1xf32>
    %38 = vector.shape_cast %37 : vector<8x1xf32> to vector<1x8x1xf32>
    %cst_10 = arith.constant dense<0.000000e+00> : vector<1xf32>
    %39 = vector.multi_reduction <add>, %38, %cst_10 [1, 2] : vector<1x8x1xf32> to vector<1xf32>
    %40 = vector.shape_cast %39 : vector<1xf32> to vector<1x1x1xf32>
    %41 = vector.extract %40[0, 0, 0] : f32 from vector<1x1x1xf32>
    %42 = vector.broadcast %41 : f32 to vector<1x8x128xf32>
    %c0_11 = arith.constant 0 : index
    %c0_12 = arith.constant 0 : index
    %c0_13 = arith.constant 0 : index
    %43 = vector.load %arg3[%c0_11, %c0_12, %c0_13] : memref<1x8x128xf32, #tpu.memory_space<vmem>>, vector<1x8x128xf32>
    tpu.vector_store %arg3[%c0_11, %c0_12, %c0_13], %42 {strides = array<i32>} : memref<1x8x128xf32, #tpu.memory_space<vmem>>, vector<1x8x128xf32>,
    return
  }
  func.func @transform_0(%arg0: i32) -> (i32, i32) {
    %c0_i32 = arith.constant 0 : i32
    %c0_i32_0 = arith.constant 0 : i32
    return %arg0, %c0_i32 : i32, i32
  }
  func.func @transform_1(%arg0: i32) -> (i32, i32) {
    %c0_i32 = arith.constant 0 : i32
    %c0_i32_0 = arith.constant 0 : i32
    return %arg0, %c0_i32 : i32, i32
  }
  func.func @transform_2(%arg0: i32) -> (i32, i32, i32) {
    %c0_i32 = arith.constant 0 : i32
    %c0_i32_0 = arith.constant 0 : i32
    %c0_i32_1 = arith.constant 0 : i32
    return %arg0, %c0_i32, %c0_i32_0 : i32, i32, i32
  }
}

</mosaic_0001>

<llo_original>
// kernel: tpu_custom_call.1
$region0: #{tpu_custom_call.1}
  #allocation0 [shape = 'u32[]', space=smem, size = 0x4, offset = 0x4, fixed_abs, tag = 'smem constant byte address 0x4 - core index']
  #allocation1 [shape = 'u32[144,128]{1,0:T(1,128)}', space=vmem, size = 0x12000, scoped, tag = 'internal scratch']
  %s0 = inlined_call_operand.hbm [shape: f32[8,32], index: 0, kind: input, shape index: {}]
  %s1 = inlined_call_operand.hbm [shape: f32[8,32], index: 1, kind: input, shape index: {}]
  %s2 = inlined_call_operand.hbm [shape: f32[1,8,128], index: 2, kind: output, shape index: {}]
  %s3 = sld [smem:[#allocation0]]
  $region26: #{tpu_custom_call.1} parent=0
    _
  %s5 = ssub.s32 1, %s3
  %s6 = scalar_select 0, %s5, %s3
  $region1: #{tpu_custom_call.1} parent=0
    #allocation2 [shape = 'u8[4096]{0}', space=vmem, size = 0x1000, scoped, tag = 'input window, operand 0, single buffered']
    #allocation3 [shape = 's32[1]{0}', space=sflag, size = 0x4, scoped, tag = 'scoped memory for tpu_custom_call.1']
    #allocation4 [shape = 's32[1]{0}', space=sflag, size = 0x4, scoped, tag = 'scoped memory for tpu_custom_call.1']
    #allocation5 [shape = 'u8[4096]{0}', space=vmem, size = 0x1000, scoped, tag = 'input window, operand 1, single buffered']
    #allocation6 [shape = 's32[1]{0}', space=sflag, size = 0x4, scoped, tag = 'scoped memory for tpu_custom_call.1']
    #allocation7 [shape = 'u8[4096]{0}', space=vmem, size = 0x1000, scoped, tag = 'output window, operand 0, single buffered']
    %7 = vsyncpa [#allocation3], 0
    %8 = vsyncpa [#allocation6], 0
    %9 = vsyncpa [#allocation4], 0
    // Predicated region
    $region2: #{tpu_custom_call.1} parent=1 // pred_check
      _
    $region3: #{tpu_custom_call.1} parent=1 // pred_check_branch
      %11 = sbr.rel (0) target = $region5
    $region4: #{tpu_custom_call.1} parent=1 // pred_region
      %s13 = ssub.s32 128, 128
      %14 = vsyncadd [#allocation3], %s13
      %s16 = sshll.u32 [#allocation2], 4
      %s17 = int_to_ptr.vmem [resolvable:$true] %s16
      %19 = dma.hbm_to_vmem [thread:$0]  %s0, 128, %s17, [#allocation3]
    $region5: #{tpu_custom_call.1} parent=1 // pred_fallthru
      _
    // Predicated region
    $region6: #{tpu_custom_call.1} parent=1 // pred_check
      _
    $region7: #{tpu_custom_call.1} parent=1 // pred_check_branch
      %21 = sbr.rel (0) target = $region9
    $region8: #{tpu_custom_call.1} parent=1 // pred_region
      %s23 = ssub.s32 128, 128
      %24 = vsyncadd [#allocation6], %s23
      %s26 = sshll.u32 [#allocation5], 4
      %s27 = int_to_ptr.vmem [resolvable:$true] %s26
      %29 = dma.hbm_to_vmem [thread:$0]  %s1, 128, %s27, [#allocation6]
    $region9: #{tpu_custom_call.1} parent=1 // pred_fallthru
      _
    // Predicated region
    $region10: #{tpu_custom_call.1} parent=1 // pred_check
      _
    $region11: #{tpu_custom_call.1} parent=1 // pred_check_branch
      %31 = sbr.rel (0) target = $region13
    $region12: #{tpu_custom_call.1} parent=1 // pred_region
      %32 = dma.done [#allocation3], 128
    $region13: #{tpu_custom_call.1} parent=1 // pred_fallthru
      _
    // Predicated region
    $region14: #{tpu_custom_call.1} parent=1 // pred_check
      _
    $region15: #{tpu_custom_call.1} parent=1 // pred_check_branch
      %34 = sbr.rel (0) target = $region17
    $region16: #{tpu_custom_call.1} parent=1 // pred_region
      %35 = dma.done [#allocation6], 128
    $region17: #{tpu_custom_call.1} parent=1 // pred_fallthru
      _
    %v36 = vld [vmem:[#allocation2] sm:$0xff]
    %v37 = vmul.f32 %v36, 0.25
    %v38 = vld [vmem:[#allocation5] sm:$0xff]
    %v39 = vmul.f32 %v38, 0.25
    %vm40 = vcmask 261120
    %v41 = vsel %vm40, %v37, -inf
    %42 = vmax.xlane.f32.xlu0 %v41
    %v43 = vpop.xlane.xlu0 %42
    %v44 = vsub.f32 %v37, %v43
    %v45 = vmul.f32 %v44, 1.442695
    %v46 = vpow.pop %v45
    %v47 = vsel %vm40, %v46, 0.0
    %48 = vadd.xlane.f32.xlu0 %v47
    %v49 = vpop.xlane.xlu0 %48
    %v50 = vlog2.pop %v49
    %v51 = vmul.f32 %v50, 0.6931472
    %v52 = vsub.f32 %v44, %v51
    %v53 = vsel %vm40, %v39, -inf
    %54 = vmax.xlane.f32.xlu0 %v53
    %v55 = vpop.xlane.xlu0 %54
    %v56 = vsub.f32 %v39, %v55
    %v57 = vmul.f32 %v56, 1.442695
    %v58 = vpow.pop %v57
    %v59 = vsel %vm40, %v58, 0.0
    %60 = vadd.xlane.f32.xlu0 %v59
    %v61 = vpop.xlane.xlu0 %60
    %v62 = vlog2.pop %v61
    %v63 = vmul.f32 %v62, 0.6931472
    %v64 = vsub.f32 %v56, %v63
    %v65 = vrcp.pop %v61
    %v66 = vmul.f32 1.0, %v65
    %v67 = vmul.f32 %v58, %v66
    %v68 = vsub.f32 %v64, %v52
    %v69 = vmul.f32 %v67, %v68
    %v70 = vsel %vm40, %v69, 0.0
    %71 = vadd.xlane.f32.xlu0 %v70
    %v72 = vpop.xlane.xlu0 %71
    %vm73 = vcmask 7168
    %v74 = vsel %vm73, %v72, 0.0
    %75 = vadd.xlane.f32.xlu0 %v74
    %v76 = vpop.xlane.xlu0 %75
    %v77 = vrot.slane %v76, 4
    %v78 = vadd.f32 %v76, %v77
    %v79 = vrot.slane %v78, 2
    %v80 = vadd.f32 %v78, %v79
    %v81 = vrot.slane %v80, 1
    %v82 = vadd.f32 %v80, %v81
    %s83 = vtos %v82
    %v84 = vstv %s83
    %85 = vst [vmem:[#allocation7] sm:$0xff] %v84
    // Predicated region
    $region18: #{tpu_custom_call.1} parent=1 // pred_check
      _
    $region19: #{tpu_custom_call.1} parent=1 // pred_check_branch
      %87 = sbr.rel (0) target = $region21
    $region20: #{tpu_custom_call.1} parent=1 // pred_region
      %s89 = ssub.s32 128, 128
      %90 = vsyncadd [#allocation4], %s89
      %s92 = sshll.u32 [#allocation7], 4
      %s93 = int_to_ptr.vmem [resolvable:$true] %s92
      %95 = dma.vmem_to_hbm [thread:$0]  %s93, 128, %s2, [#allocation4]
    $region21: #{tpu_custom_call.1} parent=1 // pred_fallthru
      _
    // Predicated region
    $region22: #{tpu_custom_call.1} parent=1 // pred_check
      _
    $region23: #{tpu_custom_call.1} parent=1 // pred_check_branch
      %97 = sbr.rel (0) target = $region25
    $region24: #{tpu_custom_call.1} parent=1 // pred_region
      %98 = dma.done [#allocation4], 128
    $region25: #{tpu_custom_call.1} parent=1 // pred_fallthru
      _
    %99 = vsyncpa [#allocation3], 1
    %100 = vsyncpa [#allocation6], 1
    %101 = vsyncpa [#allocation4], 1

</llo_original>
